<compile_context>
chip_gen: v5e
topology: v5e:2x2
jax: 0.10.0
libtpu: 0.0.40
codegen_flags: <defaults>
</compile_context>

<pallas_src>
import functools
import math
import numpy as np

import jax
import jax.numpy as jnp
from jax import lax
from jax.experimental import pallas as pl
from jax.experimental.pallas import tpu as pltpu

# ----------------------------- model config ---------------------------------
B = 2            # batch
L = 8            # sequence length
D_MODEL = 32     # d_model
N_HEADS = 4      # heads
D_HEAD = D_MODEL // N_HEADS
D_FF = 4 * D_MODEL            # d_ff default = 4 * d_model
LN_EPS = 1e-5
VEC_W = max(128, D_FF)        # lane width of the packed small-vector table
SLAB_W = 128                  # lane width of the packed output slab (out | attn | pad)
SCALE = 1.0 / math.sqrt(D_HEAD)
NEG_BIG = -1e30               # additive mask for cross-batch score columns


# ------------------------------ Pallas kernel --------------------------------
def encoder_layer_kernel(
    x_ref,        # (bb, L, D)
    wqkv_ref,     # (D, 3D)            packed [Wq*scale | Wk | Wv]
    wo_ref,       # (D, D)
    w1_ref,       # (D, D_FF)          conv1 (k=1), pre-transposed
    w2_ref,       # (D_FF, D)          conv2 (k=1), pre-transposed
    vec_ref,      # (8, VEC_W)         packed bqkv,bo,b1,b2,g1,be1,g2,be2 (row-padded)
    kmask_ref,    # (H*bb*L, D)        0/1 head selector (multiplicative)
    seg_ref,      # (H*bb*L, H*bb*L)   0/1 per-head segment-sum matrix
    bneg_ref,     # (bb*L, H*bb*L)     additive cross-batch mask (0 / -1e30)
    slab_ref,     # (bb*L, SLAB_W)     [ out (D) | attn (H*bb*L) | pad ]
    *, bb,        # static: batch elements per grid step
):
    f32 = jnp.float32
    hbl = N_HEADS * bb * L
    x2 = x_ref[...].reshape(bb * L, D_MODEL)        # merge leading dims (minor dim unchanged)

    vec = vec_ref[...]                              # (8, VEC_W)
    bqkv = vec[0:1, :3 * D_MODEL]
    bo   = vec[1:2, :D_MODEL]
    b1   = vec[2:3, :D_FF]
    b2   = vec[3:4, :D_MODEL]
    g1   = vec[4:5, :D_MODEL]
    be1  = vec[5:6, :D_MODEL]
    g2   = vec[6:7, :D_MODEL]
    be2  = vec[7:8, :D_MODEL]

    # ---- packed Q/K/V projection: one MXU matmul + one bias add ----
    qkv = jnp.dot(x2, wqkv_ref[...], preferred_element_type=f32) + bqkv   # (bb*L, 3D)
    q = qkv[:, 0:D_MODEL]                            # already scaled by 1/sqrt(d_head)
    k = qkv[:, D_MODEL:2 * D_MODEL]
    v = qkv[:, 2 * D_MODEL:3 * D_MODEL]

    kmask = kmask_ref[...]                           # (hbl, D)
    seg   = seg_ref[...]                             # (hbl, hbl)
    bneg  = bneg_ref[...]                            # (bb*L, hbl)

    # ---- all heads & all batch elements at once via block-diagonal operands ----
    # Row layout of the block-diagonal operands: index = h*(bb*L) + (b*L + j).
    k_bd = jnp.concatenate([k] * N_HEADS, axis=0) * kmask    # (hbl, D)
    v_bd = jnp.concatenate([v] * N_HEADS, axis=0) * kmask    # (hbl, D)

    # scores: contract feature dim of both operands (no transpose needed on K)
    s = lax.dot_general(q, k_bd, (((1,), (1,)), ((), ())),
                        preferred_element_type=f32)           # (bb*L, hbl)
    s = s + bneg                                              # kill cross-batch columns
    s = s - jnp.max(s, axis=-1, keepdims=True)                # per-row shift (softmax-invariant)
    p = jnp.exp(s)                                            # cross-batch entries underflow to 0
    # per-head denominator (batch-agnostic segments -> strictly positive, masked cols stay 0)
    denom = jnp.dot(p, seg, preferred_element_type=f32)
    a = p * pl.reciprocal(denom)                              # softmax over keys, per head

    ctx = jnp.dot(a, v_bd, preferred_element_type=f32)        # (bb*L, D), heads already merged

    # ---- output projection + residual (dropout = identity in eval) ----
    new_x = jnp.dot(ctx, wo_ref[...], preferred_element_type=f32) + bo
    x1 = x2 + new_x

    # ---- LayerNorm1 (var = E[x^2] - mu^2: independent reductions) ----
    mu1 = jnp.mean(x1, axis=-1, keepdims=True)
    ms1 = jnp.mean(x1 * x1, axis=-1, keepdims=True)
    xn = (x1 - mu1) * lax.rsqrt(ms1 - mu1 * mu1 + LN_EPS) * g1 + be1

    # ---- pointwise FFN: conv1(k=1) -> relu -> conv2(k=1) ----
    h1 = jnp.maximum(jnp.dot(xn, w1_ref[...], preferred_element_type=f32) + b1, 0.0)
    y = jnp.dot(h1, w2_ref[...], preferred_element_type=f32) + b2

    # ---- residual + LayerNorm2 ----
    z = xn + y
    mu2 = jnp.mean(z, axis=-1, keepdims=True)
    ms2 = jnp.mean(z * z, axis=-1, keepdims=True)
    out = (z - mu2) * lax.rsqrt(ms2 - mu2 * mu2 + LN_EPS) * g2 + be2

    # ---- single lane-dense (128-wide) store: [ out | attn | pad ] ----
    pad_w = SLAB_W - D_MODEL - hbl
    parts = [out, a]
    if pad_w > 0:
        parts.append(jnp.zeros((bb * L, pad_w), f32))
    slab_ref[...] = jnp.concatenate(parts, axis=-1)


# ------------------------------ host-side helpers -----------------------------
def pack_params(raw):
    """Pack raw per-tensor params into (w_qkv, w_out, w_ffn1, w_ffn2, vec_table).

    The softmax scale 1/sqrt(d_head) is folded into Wq / bq here.
    """
    (wq, bq, wk, bk, wv, bv, wo, bo, w1, b1, w2, b2, g1, be1, g2, be2) = raw
    wq_s = np.asarray(wq, np.float32) * SCALE
    bq_s = np.asarray(bq, np.float32) * SCALE
    wqkv = np.concatenate([wq_s, np.asarray(wk, np.float32), np.asarray(wv, np.float32)], axis=1)
    bqkv = np.concatenate([bq_s.reshape(-1),
                           np.asarray(bk, np.float32).reshape(-1),
                           np.asarray(bv, np.float32).reshape(-1)])
    rows = (bqkv, bo, b1, b2, g1, be1, g2, be2)
    vecs = np.zeros((len(rows), VEC_W), np.float32)
    for i, r in enumerate(rows):
        flat = np.asarray(r, np.float32).reshape(-1)
        vecs[i, :flat.shape[0]] = flat
    return (jnp.asarray(wqkv), jnp.asarray(np.asarray(wo, np.float32)),
            jnp.asarray(np.asarray(w1, np.float32)), jnp.asarray(np.asarray(w2, np.float32)),
            jnp.asarray(vecs))


def _attn_constants(bb):
    """Host-precomputed selector / segment / batch masks for a bb-element grid step."""
    hbl = N_HEADS * bb * L
    h_of_c = np.arange(hbl) // (bb * L)                       # head of each key column
    d_head = np.arange(D_MODEL) // D_HEAD                     # head of each feature
    kmask = (h_of_c[:, None] == d_head[None, :]).astype(np.float32)        # (hbl, D)
    seg = (h_of_c[:, None] == h_of_c[None, :]).astype(np.float32)          # (hbl, hbl)
    qb = np.arange(bb * L) // L                               # batch of each query row
    kb = (np.arange(hbl) % (bb * L)) // L                     # batch of each key column
    bneg = np.where(qb[:, None] == kb[None, :], 0.0, NEG_BIG).astype(np.float32)  # (bb*L, hbl)
    return jnp.asarray(kmask), jnp.asarray(seg), jnp.asarray(bneg)


# ------------------------------ wrapper --------------------------------------
def encoder_layer(x, packed, *, fold_batch=True):
    """x: [B, L, D] float32.  Returns (out [B, L, D], attn [B, H, L, L]).

    fold_batch=True  -> grid=(1,), both batch elements in one step (default; best at toy shapes).
    fold_batch=False -> grid=(B,), "parallel" batch axis (benchmark this on dual-TC v7x).
    """
    wqkv, wo, w1, w2, vecs = packed
    bb = B if fold_batch else 1
    grid = (B // bb,)
    hbl = N_HEADS * bb * L
    kmask, seg, bneg = _attn_constants(bb)

    kernel = functools.partial(encoder_layer_kernel, bb=bb)

    in_specs = [pl.BlockSpec((bb, L, D_MODEL), lambda i: (i, 0, 0))] + [
        pl.BlockSpec(a.shape, lambda i: (0, 0))               # whole-array weight / constant tiles
        for a in (wqkv, wo, w1, w2, vecs, kmask, seg, bneg)
    ]
    out_specs = pl.BlockSpec((bb * L, SLAB_W), lambda i: (i, 0))
    out_shape = jax.ShapeDtypeStruct((B * L, SLAB_W), jnp.float32)

    slab = pl.pallas_call(
        kernel,
        out_shape=out_shape,
        grid_spec=pltpu.PrefetchScalarGridSpec(
            num_scalar_prefetch=0,
            grid=grid,
            in_specs=in_specs,
            out_specs=out_specs,
        ),
        compiler_params=pltpu.CompilerParams(
            dimension_semantics=("arbitrary",) if fold_batch else ("parallel",)),
    )(x, wqkv, wo, w1, w2, vecs, kmask, seg, bneg)

    # ---- unpack the lane-dense slab (free XLA plumbing) ----
    out = slab[:, :D_MODEL].reshape(B, L, D_MODEL)
    a_flat = slab[:, D_MODEL:D_MODEL + hbl]                   # (B*L, hbl)
    if bb == 1:
        attn = a_flat.reshape(B, L, N_HEADS, L).transpose(0, 2, 1, 3)
    else:
        a5 = a_flat.reshape(bb, L, N_HEADS, bb, L)            # [b, i, h, b', j]
        attn = jnp.stack([a5[b, :, :, b, :] for b in range(bb)], axis=0)   # (B, L, H, L)
        attn = attn.transpose(0, 2, 1, 3)
    return out, attn


# ------------------------- pure-JAX reference --------------------------------
def encoder_layer_ref(x, raw):
    (wq, bq, wk, bk, wv, bv, wo, bo, w1, b1, w2, b2, g1, be1, g2, be2) = raw
    q = x @ wq + bq[0]
    k = x @ wk + bk[0]
    v = x @ wv + bv[0]
    qh = q.reshape(B, L, N_HEADS, D_HEAD).transpose(0, 2, 1, 3)
    kh = k.reshape(B, L, N_HEADS, D_HEAD).transpose(0, 2, 1, 3)
    vh = v.reshape(B, L, N_HEADS, D_HEAD).transpose(0, 2, 1, 3)
    s = jnp.einsum("bhqd,bhkd->bhqk", qh, kh) / math.sqrt(D_HEAD)
    a = jax.nn.softmax(s, axis=-1)
    ctx = jnp.einsum("bhqk,bhkd->bhqd", a, vh).transpose(0, 2, 1, 3).reshape(B, L, D_MODEL)
    new_x = ctx @ wo + bo[0]
    x1 = x + new_x

    def ln(t, g, be):
        mu = jnp.mean(t, -1, keepdims=True)
        var = jnp.mean((t - mu) ** 2, -1, keepdims=True)
        return (t - mu) * jax.lax.rsqrt(var + LN_EPS) * g[0] + be[0]

    xn = ln(x1, g1, be1)
    y = jnp.maximum(xn @ w1 + b1[0], 0.0) @ w2 + b2[0]
    return ln(xn + y, g2, be2), a


# ------------------------------ main ------------------------------------------
if __name__ == "__main__":
    key = jax.random.PRNGKey(0)
    ks = jax.random.split(key, 16)

    def w(kk, shape, scale=0.05):
        return (scale * jax.random.normal(kk, shape)).astype(jnp.float32)

    raw_params = (
        w(ks[0], (D_MODEL, D_MODEL)), w(ks[1], (1, D_MODEL)),     # Wq, bq
        w(ks[2], (D_MODEL, D_MODEL)), w(ks[3], (1, D_MODEL)),     # Wk, bk
        w(ks[4], (D_MODEL, D_MODEL)), w(ks[5], (1, D_MODEL)),     # Wv, bv
        w(ks[6], (D_MODEL, D_MODEL)), w(ks[7], (1, D_MODEL)),     # Wo, bo
        w(ks[8], (D_MODEL, D_FF)),    w(ks[9], (1, D_FF)),        # conv1 (pre-transposed), b1
        w(ks[10], (D_FF, D_MODEL)),   w(ks[11], (1, D_MODEL)),    # conv2 (pre-transposed), b2
        jnp.ones((1, D_MODEL), jnp.float32), jnp.zeros((1, D_MODEL), jnp.float32),  # LN1
        jnp.ones((1, D_MODEL), jnp.float32), jnp.zeros((1, D_MODEL), jnp.float32),  # LN2
    )
    packed_params = pack_params(raw_params)

    x = jax.random.normal(ks[12], (B, L, D_MODEL), dtype=jnp.float32)

    ref_out, ref_attn = encoder_layer_ref(x, raw_params)

    # default folded path (grid=(1,))
    out, attn = encoder_layer(x, packed_params, fold_batch=True)
    out = jax.block_until_ready(out)
    attn = jax.block_until_ready(attn)
    np.testing.assert_allclose(np.asarray(out), np.asarray(ref_out), rtol=2e-5, atol=2e-5)
    np.testing.assert_allclose(np.asarray(attn), np.asarray(ref_attn), rtol=2e-5, atol=2e-5)

    # batch-split path (grid=(B,), "parallel") — the variant to benchmark on dual-TC chips
    out2, attn2 = encoder_layer(x, packed_params, fold_batch=False)
    out2 = jax.block_until_ready(out2)
    attn2 = jax.block_until_ready(attn2)
    np.testing.assert_allclose(np.asarray(out2), np.asarray(ref_out), rtol=2e-5, atol=2e-5)
    np.testing.assert_allclose(np.asarray(attn2), np.asarray(ref_attn), rtol=2e-5, atol=2e-5)

    print("KERNEL_OK")
</pallas_src>

<mosaic_0001>
module attributes {stable_mosaic.version = 11 : i64} {
  func.func @encoder_layer_kernel(%arg0: i32, %arg1: memref<2x8x32xf32, #tpu.memory_space<vmem>>, %arg2: memref<32x96xf32, #tpu.memory_space<vmem>>, %arg3: memref<32x32xf32, #tpu.memory_space<vmem>>, %arg4: memref<32x128xf32, #tpu.memory_space<vmem>>, %arg5: memref<128x32xf32, #tpu.memory_space<vmem>>, %arg6: memref<8x128xf32, #tpu.memory_space<vmem>>, %arg7: memref<64x32xf32, #tpu.memory_space<vmem>>, %arg8: memref<64x64xf32, #tpu.memory_space<vmem>>, %arg9: memref<16x64xf32, #tpu.memory_space<vmem>>, %arg10: memref<16x128xf32, #tpu.memory_space<vmem>>) attributes {dimension_semantics = [#tpu.dimension_semantics<arbitrary>], iteration_bounds = array<i64: 1>, scalar_prefetch = 0 : i64, scratch_operands = 0 : i64, tpu.core_type = #tpu.core_type<tc>, window_params = [{transform_indices = @transform_0, window_bounds = array<i64: 2, 8, 32>}, {pipeline_mode = #tpu.pipeline_mode<synchronous>, transform_indices = @transform_1, window_bounds = array<i64: 32, 96>}, {pipeline_mode = #tpu.pipeline_mode<synchronous>, transform_indices = @transform_2, window_bounds = array<i64: 32, 32>}, {pipeline_mode = #tpu.pipeline_mode<synchronous>, transform_indices = @transform_3, window_bounds = array<i64: 32, 128>}, {pipeline_mode = #tpu.pipeline_mode<synchronous>, transform_indices = @transform_4, window_bounds = array<i64: 128, 32>}, {pipeline_mode = #tpu.pipeline_mode<synchronous>, transform_indices = @transform_5, window_bounds = array<i64: 8, 128>}, {pipeline_mode = #tpu.pipeline_mode<synchronous>, transform_indices = @transform_6, window_bounds = array<i64: 64, 32>}, {pipeline_mode = #tpu.pipeline_mode<synchronous>, transform_indices = @transform_7, window_bounds = array<i64: 64, 64>}, {pipeline_mode = #tpu.pipeline_mode<synchronous>, transform_indices = @transform_8, window_bounds = array<i64: 16, 64>}, {transform_indices = @transform_9, window_bounds = array<i64: 16, 128>}]} {
    %c0 = arith.constant 0 : index
    %c0_0 = arith.constant 0 : index
    %c0_1 = arith.constant 0 : index
    %0 = vector.load %arg1[%c0, %c0_0, %c0_1] : memref<2x8x32xf32, #tpu.memory_space<vmem>>, vector<2x8x32xf32>
    %1 = vector.shape_cast %0 : vector<2x8x32xf32> to vector<16x32xf32>
    %c0_2 = arith.constant 0 : index
    %c0_3 = arith.constant 0 : index
    %2 = vector.load %arg6[%c0_2, %c0_3] : memref<8x128xf32, #tpu.memory_space<vmem>>, vector<8x128xf32>
    %3 = vector.extract_strided_slice %2 {offsets = [0, 0], sizes = [1, 96], strides = [1, 1]} : vector<8x128xf32> to vector<1x96xf32>
    %4 = vector.extract_strided_slice %2 {offsets = [1, 0], sizes = [1, 32], strides = [1, 1]} : vector<8x128xf32> to vector<1x32xf32>
    %5 = vector.extract_strided_slice %2 {offsets = [2, 0], sizes = [1, 128], strides = [1, 1]} : vector<8x128xf32> to vector<1x128xf32>
    %6 = vector.extract_strided_slice %2 {offsets = [3, 0], sizes = [1, 32], strides = [1, 1]} : vector<8x128xf32> to vector<1x32xf32>
    %7 = vector.extract_strided_slice %2 {offsets = [4, 0], sizes = [1, 32], strides = [1, 1]} : vector<8x128xf32> to vector<1x32xf32>
    %8 = vector.extract_strided_slice %2 {offsets = [5, 0], sizes = [1, 32], strides = [1, 1]} : vector<8x128xf32> to vector<1x32xf32>
    %9 = vector.extract_strided_slice %2 {offsets = [6, 0], sizes = [1, 32], strides = [1, 1]} : vector<8x128xf32> to vector<1x32xf32>
    %10 = vector.extract_strided_slice %2 {offsets = [7, 0], sizes = [1, 32], strides = [1, 1]} : vector<8x128xf32> to vector<1x32xf32>
    %c0_4 = arith.constant 0 : index
    %c0_5 = arith.constant 0 : index
    %11 = vector.load %arg2[%c0_4, %c0_5] : memref<32x96xf32, #tpu.memory_space<vmem>>, vector<32x96xf32>
    %cst = arith.constant dense<0.000000e+00> : vector<16x96xf32>
    %12 = tpu.matmul %1, %11, %cst {dimension_numbers = #tpu.dot_dimension_numbers<[1], [0], [0], [1], [0, 0, 1, 1], [], []>} : vector<16x32xf32>, vector<32x96xf32>, vector<16x96xf32> -> vector<16x96xf32>
    %13 = vector.broadcast %3 : vector<1x96xf32> to vector<16x96xf32>
    %14 = arith.addf %12, %13 : vector<16x96xf32>
    %15 = vector.extract_strided_slice %14 {offsets = [0, 0], sizes = [16, 32], strides = [1, 1]} : vector<16x96xf32> to vector<16x32xf32>
    %16 = vector.extract_strided_slice %14 {offsets = [0, 32], sizes = [16, 32], strides = [1, 1]} : vector<16x96xf32> to vector<16x32xf32>
    %17 = vector.extract_strided_slice %14 {offsets = [0, 64], sizes = [16, 32], strides = [1, 1]} : vector<16x96xf32> to vector<16x32xf32>
    %c0_6 = arith.constant 0 : index
    %c0_7 = arith.constant 0 : index
    %18 = vector.load %arg7[%c0_6, %c0_7] : memref<64x32xf32, #tpu.memory_space<vmem>>, vector<64x32xf32>
    %c0_8 = arith.constant 0 : index
    %c0_9 = arith.constant 0 : index
    %19 = vector.load %arg8[%c0_8, %c0_9] : memref<64x64xf32, #tpu.memory_space<vmem>>, vector<64x64xf32>
    %c0_10 = arith.constant 0 : index
    %c0_11 = arith.constant 0 : index
    %20 = vector.load %arg9[%c0_10, %c0_11] : memref<16x64xf32, #tpu.memory_space<vmem>>, vector<16x64xf32>
    %21 = tpu.concatenate %16, %16, %16, %16 in 0 : vector<16x32xf32>, vector<16x32xf32>, vector<16x32xf32>, vector<16x32xf32> -> vector<64x32xf32>
    %22 = arith.mulf %21, %18 : vector<64x32xf32>
    %23 = tpu.concatenate %17, %17, %17, %17 in 0 : vector<16x32xf32>, vector<16x32xf32>, vector<16x32xf32>, vector<16x32xf32> -> vector<64x32xf32>
    %24 = arith.mulf %23, %18 : vector<64x32xf32>
    %cst_12 = arith.constant dense<0.000000e+00> : vector<16x64xf32>
    %25 = tpu.matmul %15, %22, %cst_12 {dimension_numbers = #tpu.dot_dimension_numbers<[1], [1], [0], [0], [0, 0, 1, 0], [], []>} : vector<16x32xf32>, vector<64x32xf32>, vector<16x64xf32> -> vector<16x64xf32>
    %26 = arith.addf %25, %20 : vector<16x64xf32>
    %cst_13 = arith.constant dense<0xFF800000> : vector<16xf32>
    %27 = vector.multi_reduction <maximumf>, %26, %cst_13 [1] : vector<16x64xf32> to vector<16xf32>
    %28 = vector.shape_cast %27 : vector<16xf32> to vector<16x1xf32>
    %29 = vector.broadcast %28 : vector<16x1xf32> to vector<16x64xf32>
    %30 = arith.subf %26, %29 : vector<16x64xf32>
    %31 = math.exp %30 : vector<16x64xf32>
    %cst_14 = arith.constant dense<0.000000e+00> : vector<16x64xf32>
    %32 = tpu.matmul %31, %19, %cst_14 {dimension_numbers = #tpu.dot_dimension_numbers<[1], [0], [0], [1], [0, 0, 1, 1], [], []>} : vector<16x64xf32>, vector<64x64xf32>, vector<16x64xf32> -> vector<16x64xf32>
    %33 = tpu.reciprocal %32 : vector<16x64xf32> -> vector<16x64xf32>
    %34 = arith.mulf %31, %33 : vector<16x64xf32>
    %cst_15 = arith.constant dense<0.000000e+00> : vector<16x32xf32>
    %35 = tpu.matmul %34, %24, %cst_15 {dimension_numbers = #tpu.dot_dimension_numbers<[1], [0], [0], [1], [0, 0, 1, 1], [], []>} : vector<16x64xf32>, vector<64x32xf32>, vector<16x32xf32> -> vector<16x32xf32>
    %c0_16 = arith.constant 0 : index
    %c0_17 = arith.constant 0 : index
    %36 = vector.load %arg3[%c0_16, %c0_17] : memref<32x32xf32, #tpu.memory_space<vmem>>, vector<32x32xf32>
    %cst_18 = arith.constant dense<0.000000e+00> : vector<16x32xf32>
    %37 = tpu.matmul %35, %36, %cst_18 {dimension_numbers = #tpu.dot_dimension_numbers<[1], [0], [0], [1], [0, 0, 1, 1], [], []>} : vector<16x32xf32>, vector<32x32xf32>, vector<16x32xf32> -> vector<16x32xf32>
    %38 = vector.broadcast %4 : vector<1x32xf32> to vector<16x32xf32>
    %39 = arith.addf %37, %38 : vector<16x32xf32>
    %40 = arith.addf %1, %39 : vector<16x32xf32>
    %cst_19 = arith.constant dense<0.000000e+00> : vector<16xf32>
    %41 = vector.multi_reduction <add>, %40, %cst_19 [1] : vector<16x32xf32> to vector<16xf32>
    %42 = vector.shape_cast %41 : vector<16xf32> to vector<16x1xf32>
    %cst_20 = arith.constant 3.200000e+01 : f32
    %43 = vector.broadcast %cst_20 : f32 to vector<16x1xf32>
    %44 = arith.divf %42, %43 : vector<16x1xf32>
    %45 = arith.mulf %40, %40 : vector<16x32xf32>
    %cst_21 = arith.constant dense<0.000000e+00> : vector<16xf32>
    %46 = vector.multi_reduction <add>, %45, %cst_21 [1] : vector<16x32xf32> to vector<16xf32>
    %47 = vector.shape_cast %46 : vector<16xf32> to vector<16x1xf32>
    %cst_22 = arith.constant 3.200000e+01 : f32
    %48 = vector.broadcast %cst_22 : f32 to vector<16x1xf32>
    %49 = arith.divf %47, %48 : vector<16x1xf32>
    %50 = vector.broadcast %44 : vector<16x1xf32> to vector<16x32xf32>
    %51 = arith.subf %40, %50 : vector<16x32xf32>
    %52 = arith.mulf %44, %44 : vector<16x1xf32>
    %53 = arith.subf %49, %52 : vector<16x1xf32>
    %cst_23 = arith.constant 9.99999974E-6 : f32
    %54 = vector.broadcast %cst_23 : f32 to vector<16x1xf32>
    %55 = arith.addf %53, %54 : vector<16x1xf32>
    %56 = math.rsqrt %55 : vector<16x1xf32>
    %57 = vector.broadcast %56 : vector<16x1xf32> to vector<16x32xf32>
    %58 = arith.mulf %51, %57 : vector<16x32xf32>
    %59 = vector.broadcast %7 : vector<1x32xf32> to vector<16x32xf32>
    %60 = arith.mulf %58, %59 : vector<16x32xf32>
    %61 = vector.broadcast %8 : vector<1x32xf32> to vector<16x32xf32>
    %62 = arith.addf %60, %61 : vector<16x32xf32>
    %c0_24 = arith.constant 0 : index
    %c0_25 = arith.constant 0 : index
    %63 = vector.load %arg4[%c0_24, %c0_25] : memref<32x128xf32, #tpu.memory_space<vmem>>, vector<32x128xf32>
    %cst_26 = arith.constant dense<0.000000e+00> : vector<16x128xf32>
    %64 = tpu.matmul %62, %63, %cst_26 {dimension_numbers = #tpu.dot_dimension_numbers<[1], [0], [0], [1], [0, 0, 1, 1], [], []>} : vector<16x32xf32>, vector<32x128xf32>, vector<16x128xf32> -> vector<16x128xf32>
    %65 = vector.broadcast %5 : vector<1x128xf32> to vector<16x128xf32>
    %66 = arith.addf %64, %65 : vector<16x128xf32>
    %cst_27 = arith.constant 0.000000e+00 : f32
    %67 = vector.broadcast %cst_27 : f32 to vector<16x128xf32>
    %68 = arith.maximumf %66, %67 : vector<16x128xf32>
    %c0_28 = arith.constant 0 : index
    %c0_29 = arith.constant 0 : index
    %69 = vector.load %arg5[%c0_28, %c0_29] : memref<128x32xf32, #tpu.memory_space<vmem>>, vector<128x32xf32>
    %cst_30 = arith.constant dense<0.000000e+00> : vector<16x32xf32>
    %70 = tpu.matmul %68, %69, %cst_30 {dimension_numbers = #tpu.dot_dimension_numbers<[1], [0], [0], [1], [0, 0, 1, 1], [], []>} : vector<16x128xf32>, vector<128x32xf32>, vector<16x32xf32> -> vector<16x32xf32>
    %71 = vector.broadcast %6 : vector<1x32xf32> to vector<16x32xf32>
    %72 = arith.addf %70, %71 : vector<16x32xf32>
    %73 = arith.addf %62, %72 : vector<16x32xf32>
    %cst_31 = arith.constant dense<0.000000e+00> : vector<16xf32>
    %74 = vector.multi_reduction <add>, %73, %cst_31 [1] : vector<16x32xf32> to vector<16xf32>
    %75 = vector.shape_cast %74 : vector<16xf32> to vector<16x1xf32>
    %cst_32 = arith.constant 3.200000e+01 : f32
    %76 = vector.broadcast %cst_32 : f32 to vector<16x1xf32>
    %77 = arith.divf %75, %76 : vector<16x1xf32>
    %78 = arith.mulf %73, %73 : vector<16x32xf32>
    %cst_33 = arith.constant dense<0.000000e+00> : vector<16xf32>
    %79 = vector.multi_reduction <add>, %78, %cst_33 [1] : vector<16x32xf32> to vector<16xf32>
    %80 = vector.shape_cast %79 : vector<16xf32> to vector<16x1xf32>
    %cst_34 = arith.constant 3.200000e+01 : f32
    %81 = vector.broadcast %cst_34 : f32 to vector<16x1xf32>
    %82 = arith.divf %80, %81 : vector<16x1xf32>
    %83 = vector.broadcast %77 : vector<16x1xf32> to vector<16x32xf32>
    %84 = arith.subf %73, %83 : vector<16x32xf32>
    %85 = arith.mulf %77, %77 : vector<16x1xf32>
    %86 = arith.subf %82, %85 : vector<16x1xf32>
    %cst_35 = arith.constant 9.99999974E-6 : f32
    %87 = vector.broadcast %cst_35 : f32 to vector<16x1xf32>
    %88 = arith.addf %86, %87 : vector<16x1xf32>
    %89 = math.rsqrt %88 : vector<16x1xf32>
    %90 = vector.broadcast %89 : vector<16x1xf32> to vector<16x32xf32>
    %91 = arith.mulf %84, %90 : vector<16x32xf32>
    %92 = vector.broadcast %9 : vector<1x32xf32> to vector<16x32xf32>
    %93 = arith.mulf %91, %92 : vector<16x32xf32>
    %94 = vector.broadcast %10 : vector<1x32xf32> to vector<16x32xf32>
    %95 = arith.addf %93, %94 : vector<16x32xf32>
    %cst_36 = arith.constant 0.000000e+00 : f32
    %96 = vector.broadcast %cst_36 : f32 to vector<16x32xf32>
    %97 = tpu.concatenate %95, %34, %96 in 1 : vector<16x32xf32>, vector<16x64xf32>, vector<16x32xf32> -> vector<16x128xf32>
    %c0_37 = arith.constant 0 : index
    %c0_38 = arith.constant 0 : index
    %98 = vector.load %arg10[%c0_37, %c0_38] : memref<16x128xf32, #tpu.memory_space<vmem>>, vector<16x128xf32>
    tpu.vector_store %arg10[%c0_37, %c0_38], %97 {strides = array<i32>} : memref<16x128xf32, #tpu.memory_space<vmem>>, vector<16x128xf32>,
    return
  }
  func.func @transform_0(%arg0: i32) -> (i32, i32, i32) {
    %c0_i32 = arith.constant 0 : i32
    %c0_i32_0 = arith.constant 0 : i32
    %c0_i32_1 = arith.constant 0 : i32
    return %arg0, %c0_i32, %c0_i32_0 : i32, i32, i32
  }
  func.func @transform_1(%arg0: i32) -> (i32, i32) {
    %c0_i32 = arith.constant 0 : i32
    %c0_i32_0 = arith.constant 0 : i32
    %c0_i32_1 = arith.constant 0 : i32
    return %c0_i32, %c0_i32_0 : i32, i32
  }
  func.func @transform_2(%arg0: i32) -> (i32, i32) {
    %c0_i32 = arith.constant 0 : i32
    %c0_i32_0 = arith.constant 0 : i32
    %c0_i32_1 = arith.constant 0 : i32
    return %c0_i32, %c0_i32_0 : i32, i32
  }
  func.func @transform_3(%arg0: i32) -> (i32, i32) {
    %c0_i32 = arith.constant 0 : i32
    %c0_i32_0 = arith.constant 0 : i32
    %c0_i32_1 = arith.constant 0 : i32
    return %c0_i32, %c0_i32_0 : i32, i32
  }
  func.func @transform_4(%arg0: i32) -> (i32, i32) {
    %c0_i32 = arith.constant 0 : i32
    %c0_i32_0 = arith.constant 0 : i32
    %c0_i32_1 = arith.constant 0 : i32
    return %c0_i32, %c0_i32_0 : i32, i32
  }
  func.func @transform_5(%arg0: i32) -> (i32, i32) {
    %c0_i32 = arith.constant 0 : i32
    %c0_i32_0 = arith.constant 0 : i32
    %c0_i32_1 = arith.constant 0 : i32
    return %c0_i32, %c0_i32_0 : i32, i32
  }
  func.func @transform_6(%arg0: i32) -> (i32, i32) {
    %c0_i32 = arith.constant 0 : i32
    %c0_i32_0 = arith.constant 0 : i32
    %c0_i32_1 = arith.constant 0 : i32
    return %c0_i32, %c0_i32_0 : i32, i32
  }
  func.func @transform_7(%arg0: i32) -> (i32, i32) {
    %c0_i32 = arith.constant 0 : i32
    %c0_i32_0 = arith.constant 0 : i32
    %c0_i32_1 = arith.constant 0 : i32
    return %c0_i32, %c0_i32_0 : i32, i32
  }
  func.func @transform_8(%arg0: i32) -> (i32, i32) {
    %c0_i32 = arith.constant 0 : i32
    %c0_i32_0 = arith.constant 0 : i32
    %c0_i32_1 = arith.constant 0 : i32
    return %c0_i32, %c0_i32_0 : i32, i32
  }
  func.func @transform_9(%arg0: i32) -> (i32, i32) {
    %c0_i32 = arith.constant 0 : i32
    %c0_i32_0 = arith.constant 0 : i32
    return %arg0, %c0_i32 : i32, i32
  }
}

</mosaic_0001>

<llo_original>
// kernel: tpu_custom_call.1
$region0: #{tpu_custom_call.1}
  #allocation0 [shape = 'u32[]', space=smem, size = 0x4, offset = 0x4, fixed_abs, tag = 'smem constant byte address 0x4 - core index']
  #allocation1 [shape = 'u32[72,128]{1,0:T(1,128)}', space=vmem, size = 0x9000, scoped, tag = 'internal scratch']
  %s0 = inlined_call_operand.vmem [shape: f32[2,8,32], index: 0, kind: input, shape index: {}]
  %s1 = inlined_call_operand.vmem [shape: f32[32,96], index: 1, kind: input, shape index: {}]
  %s2 = inlined_call_operand.vmem [shape: f32[32,32], index: 2, kind: input, shape index: {}]
  %s3 = inlined_call_operand.vmem [shape: f32[32,128], index: 3, kind: input, shape index: {}]
  %s4 = inlined_call_operand.vmem [shape: f32[128,32], index: 4, kind: input, shape index: {}]
  %s5 = inlined_call_operand.vmem [shape: f32[8,128], index: 5, kind: input, shape index: {}]
  %s6 = inlined_call_operand.vmem [shape: f32[64,32], index: 6, kind: input, shape index: {}]
  %s7 = inlined_call_operand.vmem [shape: f32[64,64], index: 7, kind: input, shape index: {}]
  %s8 = inlined_call_operand.vmem [shape: f32[16,64], index: 8, kind: input, shape index: {}]
  %s9 = inlined_call_operand.hbm [shape: f32[16,128], index: 9, kind: output, shape index: {}]
  %s10 = sld [smem:[#allocation0]]
  $region46: #{tpu_custom_call.1} parent=0
    _
  %s12 = ssub.s32 1, %s10
  %s13 = scalar_select 0, %s12, %s10
  $region1: #{tpu_custom_call.1} parent=0
    #allocation2 [shape = 'u8[8192]{0}', space=vmem, size = 0x2000, scoped, tag = 'output window, operand 0, single buffered']
    #allocation3 [shape = 's32[1]{0}', space=sflag, size = 0x4, scoped, tag = 'scoped memory for tpu_custom_call.1']
    %14 = vsyncpa [#allocation3], 0
    // Predicated region
    $region2: #{tpu_custom_call.1} parent=1 // pred_check
      _
    $region3: #{tpu_custom_call.1} parent=1 // pred_check_branch
      %16 = sbr.rel (0) target = $region5
    $region4: #{tpu_custom_call.1} parent=1 // pred_region
      _
    $region5: #{tpu_custom_call.1} parent=1 // pred_fallthru
      _
    // Predicated region
    $region6: #{tpu_custom_call.1} parent=1 // pred_check
      _
    $region7: #{tpu_custom_call.1} parent=1 // pred_check_branch
      %18 = sbr.rel (0) target = $region9
    $region8: #{tpu_custom_call.1} parent=1 // pred_region
      _
    $region9: #{tpu_custom_call.1} parent=1 // pred_fallthru
      _
    // Predicated region
    $region10: #{tpu_custom_call.1} parent=1 // pred_check
      _
    $region11: #{tpu_custom_call.1} parent=1 // pred_check_branch
      %20 = sbr.rel (0) target = $region13
    $region12: #{tpu_custom_call.1} parent=1 // pred_region
      _
    $region13: #{tpu_custom_call.1} parent=1 // pred_fallthru
      _
    // Predicated region
    $region14: #{tpu_custom_call.1} parent=1 // pred_check
      _
    $region15: #{tpu_custom_call.1} parent=1 // pred_check_branch
      %22 = sbr.rel (0) target = $region17
    $region16: #{tpu_custom_call.1} parent=1 // pred_region
      _
    $region17: #{tpu_custom_call.1} parent=1 // pred_fallthru
      _
    // Predicated region
    $region18: #{tpu_custom_call.1} parent=1 // pred_check
      _
    $region19: #{tpu_custom_call.1} parent=1 // pred_check_branch
      %24 = sbr.rel (0) target = $region21
    $region20: #{tpu_custom_call.1} parent=1 // pred_region
      _
    $region21: #{tpu_custom_call.1} parent=1 // pred_fallthru
      _
    // Predicated region
    $region22: #{tpu_custom_call.1} parent=1 // pred_check
      _
    $region23: #{tpu_custom_call.1} parent=1 // pred_check_branch
      %26 = sbr.rel (0) target = $region25
    $region24: #{tpu_custom_call.1} parent=1 // pred_region
      _
    $region25: #{tpu_custom_call.1} parent=1 // pred_fallthru
      _
    // Predicated region
    $region26: #{tpu_custom_call.1} parent=1 // pred_check
      _
    $region27: #{tpu_custom_call.1} parent=1 // pred_check_branch
      %28 = sbr.rel (0) target = $region29
    $region28: #{tpu_custom_call.1} parent=1 // pred_region
      _
    $region29: #{tpu_custom_call.1} parent=1 // pred_fallthru
      _
    // Predicated region
    $region30: #{tpu_custom_call.1} parent=1 // pred_check
      _
    $region31: #{tpu_custom_call.1} parent=1 // pred_check_branch
      %30 = sbr.rel (0) target = $region33
    $region32: #{tpu_custom_call.1} parent=1 // pred_region
      _
    $region33: #{tpu_custom_call.1} parent=1 // pred_fallthru
      _
    // Predicated region
    $region34: #{tpu_custom_call.1} parent=1 // pred_check
      _
    $region35: #{tpu_custom_call.1} parent=1 // pred_check_branch
      %32 = sbr.rel (0) target = $region37
    $region36: #{tpu_custom_call.1} parent=1 // pred_region
      _
    $region37: #{tpu_custom_call.1} parent=1 // pred_fallthru
      _
    %v33 = vld [vmem:[%s0] sm:$0xff]
    %v34 = vld [vmem:[%s0 + $0x8] sm:$0xff]
    %v35 = vld [vmem:[%s5] sm:$0xff]
    %v36 = vld [vmem:[%s1] sm:$0xff]
    %v37 = vld [vmem:[%s1 + $0x8] sm:$0xff]
    %v38 = vld [vmem:[%s1 + $0x10] sm:$0xff]
    %v39 = vld [vmem:[%s1 + $0x18] sm:$0xff]
    %v40 = vperm.slane %v35, 0
    %vm41 = vcmask 261120
    %v43 = vsel %vm41, %v33, 0
    %v46 = vsel %vm41, %v34, 0
    %48 = vmatpush.msra.mxu0 0.0
    %49 = vmatpush.msra.mxu0 0.0
    %50 = vmatpush.msra.mxu0 0.0
    %51 = vmatpush.msra.mxu0 0.0
    %52 = vmatpush.msra.mxu0 0.0
    %53 = vmatpush.msra.mxu0 0.0
    %54 = vmatpush.msra.mxu0 0.0
    %55 = vmatpush.msra.mxu0 0.0
    %56 = vmatpush.msra.mxu0 0.0
    %57 = vmatpush.msra.mxu0 0.0
    %58 = vmatpush.msra.mxu0 0.0
    %59 = vmatpush.msra.mxu0 0.0
    %60 = vmatpush.msra.mxu0 %v39
    %61 = vmatpush.msra.mxu0 %v38
    %62 = vmatpush.msra.mxu0 %v37
    %63 = vmatpush.msra.mxu0 %v36
    %64 = vmatmul.f32.gmra.mxu0 %v43
    %v65 = vpop.f32.mrf.mxu0
    %v66 = vadd.f32 %v40, %v65
    %67 = vmatmul.f32.gmra.mxu0 %v46
    %v68 = vpop.f32.mrf.mxu0
    %v69 = vadd.f32 %v40, %v68
    %70 = vdwg.mxu0
    %v71 = vld [vmem:[%s6] sm:$0xff]
    %v72 = vld [vmem:[%s6 + $0x8] sm:$0xff]
    %v73 = vld [vmem:[%s6 + $0x10] sm:$0xff]
    %v74 = vld [vmem:[%s6 + $0x18] sm:$0xff]
    %v75 = vld [vmem:[%s6 + $0x20] sm:$0xff]
    %v76 = vld [vmem:[%s6 + $0x28] sm:$0xff]
    %v77 = vld [vmem:[%s6 + $0x30] sm:$0xff]
    %v78 = vld [vmem:[%s6 + $0x38] sm:$0xff]
    %v79 = vld [vmem:[%s7] sm:$0xff]
    %v80 = vld [vmem:[%s7 + $0x8] sm:$0xff]
    %v81 = vld [vmem:[%s7 + $0x10] sm:$0xff]
    %v82 = vld [vmem:[%s7 + $0x18] sm:$0xff]
    %v83 = vld [vmem:[%s7 + $0x20] sm:$0xff]
    %v84 = vld [vmem:[%s7 + $0x28] sm:$0xff]
    %v85 = vld [vmem:[%s7 + $0x30] sm:$0xff]
    %v86 = vld [vmem:[%s7 + $0x38] sm:$0xff]
    %v87 = vld [vmem:[%s8] sm:$0xff]
    %v88 = vld [vmem:[%s8 + $0x8] sm:$0xff]
    %97 = vrot.lane.b32.xlu0 %v71, 32
    %v98 = vpop.permute.xlu0 %97
    %99 = vrot.lane.b32.xlu0 %v72, 32
    %v100 = vpop.permute.xlu0 %99
    %101 = vrot.lane.b32.xlu0 %v73, 32
    %v102 = vpop.permute.xlu0 %101
    %103 = vrot.lane.b32.xlu0 %v74, 32
    %v104 = vpop.permute.xlu0 %103
    %105 = vrot.lane.b32.xlu0 %v75, 32
    %v106 = vpop.permute.xlu0 %105
    %107 = vrot.lane.b32.xlu0 %v76, 32
    %v108 = vpop.permute.xlu0 %107
    %109 = vrot.lane.b32.xlu0 %v77, 32
    %v110 = vpop.permute.xlu0 %109
    %111 = vrot.lane.b32.xlu0 %v78, 32
    %v112 = vpop.permute.xlu0 %111
    %v121 = vmul.f32 %v66, %v98
    %v122 = vmul.f32 %v69, %v100
    %v123 = vmul.f32 %v66, %v102
    %v124 = vmul.f32 %v69, %v104
    %v125 = vmul.f32 %v66, %v106
    %v126 = vmul.f32 %v69, %v108
    %v127 = vmul.f32 %v66, %v110
    %v128 = vmul.f32 %v69, %v112
    %129 = vrot.lane.b32.xlu0 %v71, 64
    %v130 = vpop.permute.xlu0 %129
    %131 = vrot.lane.b32.xlu0 %v72, 64
    %v132 = vpop.permute.xlu0 %131
    %133 = vrot.lane.b32.xlu0 %v73, 64
    %v134 = vpop.permute.xlu0 %133
    %135 = vrot.lane.b32.xlu0 %v74, 64
    %v136 = vpop.permute.xlu0 %135
    %137 = vrot.lane.b32.xlu0 %v75, 64
    %v138 = vpop.permute.xlu0 %137
    %139 = vrot.lane.b32.xlu0 %v76, 64
    %v140 = vpop.permute.xlu0 %139
    %141 = vrot.lane.b32.xlu0 %v77, 64
    %v142 = vpop.permute.xlu0 %141
    %143 = vrot.lane.b32.xlu0 %v78, 64
    %v144 = vpop.permute.xlu0 %143
    %v153 = vmul.f32 %v66, %v130
    %v154 = vmul.f32 %v69, %v132
    %v155 = vmul.f32 %v66, %v134
    %v156 = vmul.f32 %v69, %v136
    %v157 = vmul.f32 %v66, %v138
    %v158 = vmul.f32 %v69, %v140
    %v159 = vmul.f32 %v66, %v142
    %v160 = vmul.f32 %v69, %v144
    %169 = vrot.lane.b32.xlu0 %v121, 96
    %v170 = vpop.permute.xlu0 %169
    %171 = vrot.lane.b32.xlu0 %v122, 96
    %v172 = vpop.permute.xlu0 %171
    %173 = vrot.lane.b32.xlu0 %v123, 96
    %v174 = vpop.permute.xlu0 %173
    %175 = vrot.lane.b32.xlu0 %v124, 96
    %v176 = vpop.permute.xlu0 %175
    %177 = vrot.lane.b32.xlu0 %v125, 96
    %v178 = vpop.permute.xlu0 %177
    %179 = vrot.lane.b32.xlu0 %v126, 96
    %v180 = vpop.permute.xlu0 %179
    %181 = vrot.lane.b32.xlu0 %v127, 96
    %v182 = vpop.permute.xlu0 %181
    %183 = vrot.lane.b32.xlu0 %v128, 96
    %v184 = vpop.permute.xlu0 %183
    %v186 = vsel %vm41, %v66, 0
    %v189 = vsel %vm41, %v69, 0
    %v191 = vsel %vm41, %v170, 0
    %v193 = vsel %vm41, %v172, 0
    %v195 = vsel %vm41, %v174, 0
    %v197 = vsel %vm41, %v176, 0
    %v199 = vsel %vm41, %v178, 0
    %v201 = vsel %vm41, %v180, 0
    %v203 = vsel %vm41, %v182, 0
    %v205 = vsel %vm41, %v184, 0
    %207 = vmatpush.xpose.msra.mxu0 0.0
    %208 = vmatpush.xpose.msra.mxu0 0.0
    %209 = vmatpush.xpose.msra.mxu0 0.0
    %210 = vmatpush.xpose.msra.mxu0 0.0
    %211 = vmatpush.xpose.msra.mxu0 0.0
    %212 = vmatpush.xpose.msra.mxu0 0.0
    %213 = vmatpush.xpose.msra.mxu0 0.0
    %214 = vmatpush.xpose.msra.mxu0 0.0
    %215 = vmatpush.xpose.msra.mxu0 %v205
    %216 = vmatpush.xpose.msra.mxu0 %v203
    %217 = vmatpush.xpose.msra.mxu0 %v201
    %218 = vmatpush.xpose.msra.mxu0 %v199
    %219 = vmatpush.xpose.msra.mxu0 %v197
    %220 = vmatpush.xpose.msra.mxu0 %v195
    %221 = vmatpush.xpose.msra.mxu0 %v193
    %222 = vmatpush.xpose.msra.mxu0 %v191
    %223 = vmatmul.f32.gmra.mxu0 %v186
    %v224 = vpop.f32.mrf.mxu0
    %v225 = vadd.f32 %v87, %v224
    %226 = vmatmul.f32.gmra.mxu0 %v189
    %v227 = vpop.f32.mrf.mxu0
    %v228 = vadd.f32 %v88, %v227
    %229 = vdwg.mxu0
    %vm230 = vcmask 523264
    %v231 = vsel %vm230, %v225, -inf
    %232 = vmax.xlane.f32.xlu0 %v231
    %v233 = vpop.xlane.xlu0 %232
    %v234 = vsel %vm230, %v228, -inf
    %235 = vmax.xlane.f32.xlu0 %v234
    %v236 = vpop.xlane.xlu0 %235
    %v237 = vsub.f32 %v225, %v233
    %v238 = vsub.f32 %v228, %v236
    %v239 = vmul.f32 %v237, 1.442695
    %v240 = vpow.pop %v239
    %v241 = vmul.f32 %v238, 1.442695
    %v242 = vpow.pop %v241
    %v244 = vsel %vm230, %v240, 0
    %v247 = vsel %vm230, %v242, 0
    %249 = vmatpush.msra.mxu0 0.0
    %250 = vmatpush.msra.mxu0 0.0
    %251 = vmatpush.msra.mxu0 0.0
    %252 = vmatpush.msra.mxu0 0.0
    %253 = vmatpush.msra.mxu0 0.0
    %254 = vmatpush.msra.mxu0 0.0
    %255 = vmatpush.msra.mxu0 0.0
    %256 = vmatpush.msra.mxu0 0.0
    %257 = vmatpush.msra.mxu0 %v86
    %258 = vmatpush.msra.mxu0 %v85
    %259 = vmatpush.msra.mxu0 %v84
    %260 = vmatpush.msra.mxu0 %v83
    %261 = vmatpush.msra.mxu0 %v82
    %262 = vmatpush.msra.mxu0 %v81
    %263 = vmatpush.msra.mxu0 %v80
    %264 = vmatpush.msra.mxu0 %v79
    %265 = vmatmul.f32.gmra.mxu0 %v244
    %v266 = vpop.f32.mrf.mxu0
    %v267 = vadd.f32 0.0, %v266
    %268 = vmatmul.f32.gmra.mxu0 %v247
    %v269 = vpop.f32.mrf.mxu0
    %v270 = vadd.f32 0.0, %v269
    %271 = vdwg.mxu0
    %v272 = vrcp.pop %v267
    %v273 = vmul.f32 %v267, %v272
    %v274 = vsub.f32 1.0, %v273
    %v275 = vmul.f32 %v272, %v274
    %v276 = vadd.f32 %v272, %v275
    %vm277 = vweird.f32 %v267
    %vm278 = vweird.f32 %v272
    %vm279 = vmor %vm277, %vm278
    %v280 = vsel %vm279, %v272, %v276
    %v281 = vand.u32 2147483647, %v267
    %vm282 = vcmp.eq.f32.partialorder %v281, 8.507059e+37
    %v283 = vand.u32 %v267, 2147483648
    %v284 = vor.u32 1.1754944e-38, %v283
    %v285 = vsel %vm282, %v284, %v280
    %v286 = vrcp.pop %v270
    %v287 = vmul.f32 %v270, %v286
    %v288 = vsub.f32 1.0, %v287
    %v289 = vmul.f32 %v286, %v288
    %v290 = vadd.f32 %v286, %v289
    %vm291 = vweird.f32 %v270
    %vm292 = vweird.f32 %v286
    %vm293 = vmor %vm291, %vm292
    %v294 = vsel %vm293, %v286, %v290
    %v295 = vand.u32 2147483647, %v270
    %vm296 = vcmp.eq.f32.partialorder %v295, 8.507059e+37
    %v297 = vand.u32 %v270, 2147483648
    %v298 = vor.u32 1.1754944e-38, %v297
    %v299 = vsel %vm296, %v298, %v294
    %v300 = vmul.f32 %v240, %v285
    %v301 = vmul.f32 %v242, %v299
    %310 = vrot.lane.b32.xlu0 %v153, 64
    %v311 = vpop.permute.xlu0 %310
    %312 = vrot.lane.b32.xlu0 %v154, 64
    %v313 = vpop.permute.xlu0 %312
    %314 = vrot.lane.b32.xlu0 %v155, 64
    %v315 = vpop.permute.xlu0 %314
    %316 = vrot.lane.b32.xlu0 %v156, 64
    %v317 = vpop.permute.xlu0 %316
    %318 = vrot.lane.b32.xlu0 %v157, 64
    %v319 = vpop.permute.xlu0 %318
    %320 = vrot.lane.b32.xlu0 %v158, 64
    %v321 = vpop.permute.xlu0 %320
    %322 = vrot.lane.b32.xlu0 %v159, 64
    %v323 = vpop.permute.xlu0 %322
    %324 = vrot.lane.b32.xlu0 %v160, 64
    %v325 = vpop.permute.xlu0 %324
    %v335 = vsel %vm230, %v300, 0
    %v338 = vsel %vm230, %v301, 0
    %340 = vmatpush.msra.mxu0 0.0
    %341 = vmatpush.msra.mxu0 0.0
    %342 = vmatpush.msra.mxu0 0.0
    %343 = vmatpush.msra.mxu0 0.0
    %344 = vmatpush.msra.mxu0 0.0
    %345 = vmatpush.msra.mxu0 0.0
    %346 = vmatpush.msra.mxu0 0.0
    %347 = vmatpush.msra.mxu0 0.0
    %348 = vmatpush.msra.mxu0 %v325
    %349 = vmatpush.msra.mxu0 %v323
    %350 = vmatpush.msra.mxu0 %v321
    %351 = vmatpush.msra.mxu0 %v319
    %352 = vmatpush.msra.mxu0 %v317
    %353 = vmatpush.msra.mxu0 %v315
    %354 = vmatpush.msra.mxu0 %v313
    %355 = vmatpush.msra.mxu0 %v311
    %356 = vmatmul.f32.gmra.mxu0 %v335
    %v357 = vpop.f32.mrf.mxu0
    %v358 = vadd.f32 0.0, %v357
    %359 = vmatmul.f32.gmra.mxu0 %v338
    %v360 = vpop.f32.mrf.mxu0
    %v361 = vadd.f32 0.0, %v360
    %362 = vdwg.mxu0
    %v363 = vld [vmem:[%s2] sm:$0xff]
    %v364 = vld [vmem:[%s2 + $0x8] sm:$0xff]
    %v365 = vld [vmem:[%s2 + $0x10] sm:$0xff]
    %v366 = vld [vmem:[%s2 + $0x18] sm:$0xff]
    %v367 = vperm.slane %v35, 1
    %v369 = vsel %vm41, %v358, 0
    %v372 = vsel %vm41, %v361, 0
    %374 = vmatpush.msra.mxu0 0.0
    %375 = vmatpush.msra.mxu0 0.0
    %376 = vmatpush.msra.mxu0 0.0
    %377 = vmatpush.msra.mxu0 0.0
    %378 = vmatpush.msra.mxu0 0.0
    %379 = vmatpush.msra.mxu0 0.0
    %380 = vmatpush.msra.mxu0 0.0
    %381 = vmatpush.msra.mxu0 0.0
    %382 = vmatpush.msra.mxu0 0.0
    %383 = vmatpush.msra.mxu0 0.0
    %384 = vmatpush.msra.mxu0 0.0
    %385 = vmatpush.msra.mxu0 0.0
    %386 = vmatpush.msra.mxu0 %v366
    %387 = vmatpush.msra.mxu0 %v365
    %388 = vmatpush.msra.mxu0 %v364
    %389 = vmatpush.msra.mxu0 %v363
    %390 = vmatmul.f32.gmra.mxu0 %v369
    %v391 = vpop.f32.mrf.mxu0
    %v392 = vadd.f32 %v367, %v391
    %393 = vmatmul.f32.gmra.mxu0 %v372
    %v394 = vpop.f32.mrf.mxu0
    %v395 = vadd.f32 %v367, %v394
    %396 = vdwg.mxu0
    %v397 = vadd.f32 %v33, %v392
    %v398 = vadd.f32 %v34, %v395
    %v399 = vsel %vm41, %v397, 0.0
    %400 = vadd.xlane.f32.xlu0 %v399
    %v401 = vpop.xlane.xlu0 %400
    %v402 = vsel %vm41, %v398, 0.0
    %403 = vadd.xlane.f32.xlu0 %v402
    %v404 = vpop.xlane.xlu0 %403
    %v405 = vrcp.pop 32.0
    %v406 = vmul.f32 32.0, %v405
    %v407 = vsub.f32 1.0, %v406
    %v408 = vmul.f32 %v405, %v407
    %v409 = vadd.f32 %v405, %v408
    %vm410 = vweird.f32 %v405
    %v411 = vsel %vm410, %v405, %v409
    %v412 = vmul.f32 %v401, %v411
    %v413 = vmul.f32 %v404, %v411
    %v414 = vmul.f32 %v397, %v397
    %v415 = vmul.f32 %v398, %v398
    %v416 = vsel %vm41, %v414, 0.0
    %417 = vadd.xlane.f32.xlu0 %v416
    %v418 = vpop.xlane.xlu0 %417
    %v419 = vsel %vm41, %v415, 0.0
    %420 = vadd.xlane.f32.xlu0 %v419
    %v421 = vpop.xlane.xlu0 %420
    %v422 = vmul.f32 %v418, %v411
    %v423 = vmul.f32 %v421, %v411
    %v424 = vsub.f32 %v397, %v412
    %v425 = vsub.f32 %v398, %v413
    %v426 = vmul.f32 %v412, %v412
    %v427 = vmul.f32 %v413, %v413
    %v428 = vsub.f32 %v422, %v426
    %v429 = vsub.f32 %v423, %v427
    %v430 = vadd.f32 %v428, 1e-05
    %v431 = vadd.f32 %v429, 1e-05
    %v432 = vrsqrt.pop %v430
    %v433 = vmul.f32 %v432, %v430
    %v434 = vmul.f32 %v433, %v432
    %v435 = vmul.f32 0.5, %v434
    %v436 = vsub.f32 1.5, %v435
    %v437 = vmul.f32 %v432, %v436
    %vm438 = vweird.f32 %v430
    %vm439 = vweird.f32 %v432
    %vm440 = vmor %vm438, %vm439
    %v441 = vsel %vm440, %v432, %v437
    %v442 = vrsqrt.pop %v431
    %v443 = vmul.f32 %v442, %v431
    %v444 = vmul.f32 %v443, %v442
    %v445 = vmul.f32 0.5, %v444
    %v446 = vsub.f32 1.5, %v445
    %v447 = vmul.f32 %v442, %v446
    %vm448 = vweird.f32 %v431
    %vm449 = vweird.f32 %v442
    %vm450 = vmor %vm448, %vm449
    %v451 = vsel %vm450, %v442, %v447
    %v452 = vmul.f32 %v424, %v441
    %v453 = vmul.f32 %v425, %v451
    %v454 = vperm.slane %v35, 4
    %v455 = vmul.f32 %v452, %v454
    %v456 = vmul.f32 %v453, %v454
    %v457 = vperm.slane %v35, 5
    %v458 = vadd.f32 %v455, %v457
    %v459 = vadd.f32 %v456, %v457
    %v460 = vld [vmem:[%s3] sm:$0xff]
    %v461 = vld [vmem:[%s3 + $0x8] sm:$0xff]
    %v462 = vld [vmem:[%s3 + $0x10] sm:$0xff]
    %v463 = vld [vmem:[%s3 + $0x18] sm:$0xff]
    %v464 = vperm.slane %v35, 2
    %v466 = vsel %vm41, %v458, 0
    %v469 = vsel %vm41, %v459, 0
    %471 = vmatpush.msra.mxu0 0.0
    %472 = vmatpush.msra.mxu0 0.0
    %473 = vmatpush.msra.mxu0 0.0
    %474 = vmatpush.msra.mxu0 0.0
    %475 = vmatpush.msra.mxu0 0.0
    %476 = vmatpush.msra.mxu0 0.0
    %477 = vmatpush.msra.mxu0 0.0
    %478 = vmatpush.msra.mxu0 0.0
    %479 = vmatpush.msra.mxu0 0.0
    %480 = vmatpush.msra.mxu0 0.0
    %481 = vmatpush.msra.mxu0 0.0
    %482 = vmatpush.msra.mxu0 0.0
    %483 = vmatpush.msra.mxu0 %v463
    %484 = vmatpush.msra.mxu0 %v462
    %485 = vmatpush.msra.mxu0 %v461
    %486 = vmatpush.msra.mxu0 %v460
    %487 = vmatmul.f32.gmra.mxu0 %v466
    %v488 = vpop.f32.mrf.mxu0
    %v489 = vadd.f32 %v464, %v488
    %490 = vmatmul.f32.gmra.mxu0 %v469
    %v491 = vpop.f32.mrf.mxu0
    %v492 = vadd.f32 %v464, %v491
    %493 = vdwg.mxu0
    %v494 = vmax.f32 %v489, 0.0
    %v495 = vmax.f32 %v492, 0.0
    %v496 = vld [vmem:[%s4] sm:$0xff]
    %v497 = vld [vmem:[%s4 + $0x8] sm:$0xff]
    %v498 = vld [vmem:[%s4 + $0x10] sm:$0xff]
    %v499 = vld [vmem:[%s4 + $0x18] sm:$0xff]
    %v500 = vld [vmem:[%s4 + $0x20] sm:$0xff]
    %v501 = vld [vmem:[%s4 + $0x28] sm:$0xff]
    %v502 = vld [vmem:[%s4 + $0x30] sm:$0xff]
    %v503 = vld [vmem:[%s4 + $0x38] sm:$0xff]
    %v504 = vld [vmem:[%s4 + $0x40] sm:$0xff]
    %v505 = vld [vmem:[%s4 + $0x48] sm:$0xff]
    %v506 = vld [vmem:[%s4 + $0x50] sm:$0xff]
    %v507 = vld [vmem:[%s4 + $0x58] sm:$0xff]
    %v508 = vld [vmem:[%s4 + $0x60] sm:$0xff]
    %v509 = vld [vmem:[%s4 + $0x68] sm:$0xff]
    %v510 = vld [vmem:[%s4 + $0x70] sm:$0xff]
    %v511 = vld [vmem:[%s4 + $0x78] sm:$0xff]
    %v512 = vperm.slane %v35, 3
    %513 = vmatpush.msra.mxu0 %v511
    %514 = vmatpush.msra.mxu0 %v510
    %515 = vmatpush.msra.mxu0 %v509
    %516 = vmatpush.msra.mxu0 %v508
    %517 = vmatpush.msra.mxu0 %v507
    %518 = vmatpush.msra.mxu0 %v506
    %519 = vmatpush.msra.mxu0 %v505
    %520 = vmatpush.msra.mxu0 %v504
    %521 = vmatpush.msra.mxu0 %v503
    %522 = vmatpush.msra.mxu0 %v502
    %523 = vmatpush.msra.mxu0 %v501
    %524 = vmatpush.msra.mxu0 %v500
    %525 = vmatpush.msra.mxu0 %v499
    %526 = vmatpush.msra.mxu0 %v498
    %527 = vmatpush.msra.mxu0 %v497
    %528 = vmatpush.msra.mxu0 %v496
    %529 = vmatmul.f32.gmra.mxu0 %v494
    %v530 = vpop.f32.mrf.mxu0
    %v531 = vadd.f32 %v512, %v530
    %532 = vmatmul.f32.gmra.mxu0 %v495
    %v533 = vpop.f32.mrf.mxu0
    %v534 = vadd.f32 %v512, %v533
    %535 = vdwg.mxu0
    %v536 = vadd.f32 %v458, %v531
    %v537 = vadd.f32 %v459, %v534
    %v538 = vsel %vm41, %v536, 0.0
    %539 = vadd.xlane.f32.xlu0 %v538
    %v540 = vpop.xlane.xlu0 %539
    %v541 = vsel %vm41, %v537, 0.0
    %542 = vadd.xlane.f32.xlu0 %v541
    %v543 = vpop.xlane.xlu0 %542
    %v544 = vmul.f32 %v540, %v411
    %v545 = vmul.f32 %v543, %v411
    %v546 = vmul.f32 %v536, %v536
    %v547 = vmul.f32 %v537, %v537
    %v548 = vsel %vm41, %v546, 0.0
    %549 = vadd.xlane.f32.xlu0 %v548
    %v550 = vpop.xlane.xlu0 %549
    %v551 = vsel %vm41, %v547, 0.0
    %552 = vadd.xlane.f32.xlu0 %v551
    %v553 = vpop.xlane.xlu0 %552
    %v554 = vmul.f32 %v550, %v411
    %v555 = vmul.f32 %v553, %v411
    %v556 = vsub.f32 %v536, %v544
    %v557 = vsub.f32 %v537, %v545
    %v558 = vmul.f32 %v544, %v544
    %v559 = vmul.f32 %v545, %v545
    %v560 = vsub.f32 %v554, %v558
    %v561 = vsub.f32 %v555, %v559
    %v562 = vadd.f32 %v560, 1e-05
    %v563 = vadd.f32 %v561, 1e-05
    %v564 = vrsqrt.pop %v562
    %v565 = vmul.f32 %v564, %v562
    %v566 = vmul.f32 %v565, %v564
    %v567 = vmul.f32 0.5, %v566
    %v568 = vsub.f32 1.5, %v567
    %v569 = vmul.f32 %v564, %v568
    %vm570 = vweird.f32 %v562
    %vm571 = vweird.f32 %v564
    %vm572 = vmor %vm570, %vm571
    %v573 = vsel %vm572, %v564, %v569
    %v574 = vrsqrt.pop %v563
    %v575 = vmul.f32 %v574, %v563
    %v576 = vmul.f32 %v575, %v574
    %v577 = vmul.f32 0.5, %v576
    %v578 = vsub.f32 1.5, %v577
    %v579 = vmul.f32 %v574, %v578
    %vm580 = vweird.f32 %v563
    %vm581 = vweird.f32 %v574
    %vm582 = vmor %vm580, %vm581
    %v583 = vsel %vm582, %v574, %v579
    %v584 = vmul.f32 %v556, %v573
    %v585 = vmul.f32 %v557, %v583
    %v586 = vperm.slane %v35, 6
    %v587 = vmul.f32 %v584, %v586
    %v588 = vmul.f32 %v585, %v586
    %v589 = vperm.slane %v35, 7
    %v590 = vadd.f32 %v587, %v589
    %v591 = vadd.f32 %v588, %v589
    %592 = vrot.lane.b32.xlu0 %v300, 32
    %v593 = vpop.permute.xlu0 %592
    %594 = vrot.lane.b32.xlu0 %v301, 32
    %v595 = vpop.permute.xlu0 %594
    %v598 = vsel %vm41, %v590, %v593
    %v599 = vsel %vm41, %v591, %v595
    %vm600 = vcmask 785408
    %v601 = vsel %vm600, %v598, 0.0
    %v602 = vsel %vm600, %v599, 0.0
    %603 = vst [vmem:[#allocation2] sm:$0xff] %v601
    %604 = vst [vmem:[#allocation2 + $0x8] sm:$0xff] %v602
    // Predicated region
    $region38: #{tpu_custom_call.1} parent=1 // pred_check
      _
    $region39: #{tpu_custom_call.1} parent=1 // pred_check_branch
      %606 = sbr.rel (0) target = $region41
    $region40: #{tpu_custom_call.1} parent=1 // pred_region
      %608 = vsyncadd [#allocation3], 0
      %s609 = sshll.u32 [#allocation2], 4
      %s610 = int_to_ptr.vmem [resolvable:$true] %s609
      %s611 = sshll.u32 %s9, 4
      %s612 = int_to_ptr.hbm [resolvable:$true] %s611
      %617 = dma.vmem_to_hbm [thread:$0]  %s610, 256, %s612, [#allocation3], 128, 128, 8
    $region41: #{tpu_custom_call.1} parent=1 // pred_fallthru
      _
    // Predicated region
    $region42: #{tpu_custom_call.1} parent=1 // pred_check
      _
    $region43: #{tpu_custom_call.1} parent=1 // pred_check_branch
      %619 = sbr.rel (0) target = $region45
    $region44: #{tpu_custom_call.1} parent=1 // pred_region
      %621 = dma.done [#allocation3], 256
    $region45: #{tpu_custom_call.1} parent=1 // pred_fallthru
      _
    %622 = vsyncpa [#allocation3], 1

</llo_original>
